<compile_context>
chip_gen: v6e
topology: v6e:2x2x1
jax: 0.10.0
libtpu: 0.0.40
codegen_flags: <defaults>
</compile_context>

<pallas_src>
import jax
import jax.numpy as jnp
from jax.experimental import pallas as pl
from jax.experimental.pallas import tpu as pltpu

KH, KW = 3, 3   # kernel_size = [3, 3], stride = [1, 1], padding = 'same'


def _round_up(x, m):
    return (x + m - 1) // m * m


def _sublane(dtype):
    return 16 if jnp.dtype(dtype).itemsize == 2 else 8


def _default_compute_dtype():
    """bf16 on v6e/v7x (halves HBM bytes); f32 on v5e and older (no native
    bf16 VPU there, and the kernel is VPU/overhead bound at small shapes)."""
    try:
        kind = jax.devices()[0].device_kind.lower()
    except Exception:
        kind = ""
    if any(t in kind for t in ("v2", "v3", "v4", "v5")):
        return jnp.float32
    return jnp.bfloat16


def _pick_band_rows(H, W, target_lanes=2048, cap_lanes=16384):
    """Row band so band_rows*W is a multiple of 128 and divides H; prefer big
    (~2048+) lane counts per block, or the whole image when it is small."""
    cands = [th for th in range(1, H + 1) if H % th == 0 and (th * W) % 128 == 0]
    if not cands:
        return H                                   # tiny/odd image: one band
    within = [th for th in cands if th * W <= cap_lanes] or [min(cands)]
    big = [th for th in within if th * W >= target_lanes]
    return min(big) if big else max(within)


def _pick_batch_block(N, PB, target_lanes=2048, max_nb=8):
    """Pack several images per grid step when PB alone is small (amortizes the
    per-grid-step fixed overhead)."""
    best = 1
    for nb in range(1, min(N, max_nb) + 1):
        if N % nb != 0:
            continue
        best = nb
        if nb * PB >= target_lanes:
            break
    return best


def conv2d_normy(x_nchw, weight_oihw, bias, logs, *,
                 compute_dtype=None, band_rows=None, batch_block=None,
                 fold_taps=None, vmem_limit_bytes=None):
    """Forward pass of Conv2dNormy.

    x_nchw      : (N, Cin, H, W)      activations (PyTorch layout)
    weight_oihw : (Cout, Cin, 3, 3)   conv weight (no bias)
    bias, logs  : (Cout,)-reshapeable ActNorm parameters
    returns     : (N, Cout, H, W)     float32, (conv(x) + bias) * exp(logs)
    """
    N, Cin, H, W = x_nchw.shape
    Cout = weight_oihw.shape[0]
    assert weight_oihw.shape == (Cout, Cin, KH, KW)

    if compute_dtype is None:
        compute_dtype = _default_compute_dtype()
    cdt = jnp.dtype(compute_dtype)

    sub = _sublane(cdt)
    Cin_p = _round_up(Cin, sub)        # sublane-aligned K pieces / scratch rows
    Cout_p = _round_up(Cout, 8)        # f32 accumulator / output sublane

    if fold_taps is None:
        # Large Cin: 9 accumulating per-tap GEMMs instead of a 9*Cin im2col slab.
        fold_taps = Cin_p < 128

    if band_rows is None:
        band_rows = _pick_band_rows(H, W)
    TH = band_rows
    assert H % TH == 0, "band_rows must divide H"
    PB = TH * W                        # pixels (lanes) per output band
    HB = H // TH                       # number of row bands
    HW = H * W
    assert PB % 128 == 0 or HB == 1, "band_rows*W must be a multiple of 128"

    if batch_block is None:
        batch_block = _pick_batch_block(N, PB)
    NB = batch_block
    assert N % NB == 0, "batch_block must divide N"
    NBLK = N // NB

    # Lane-aligned left halo (>= W+1): the HBM->scratch DMA and the halo
    # zero-fills all start on 128-lane boundaries (unmasked vst).
    LPAD = _round_up(W + 1, 128)
    WINL = _round_up(PB + LPAD + W + 1, 128)       # static per-band window
    SCRATCH_L = (HB - 1) * PB + WINL               # image + halos + last window
    RHALO = SCRATCH_L - LPAD - HW                  # >= W + 1
    lane_aligned = (PB % 128 == 0)

    # TODO(synk): for very large H*W (esp. v7x's 64 MiB VMEM) replace the
    # whole-image-resident scratch with per-band halo DMA (no cross-band
    # carry), which would also allow marking the band axis "parallel".

    def kernel(x_hbm, w_ref, scale_ref, shift_ref, o_ref, xpad_ref, dma_sem):
        nb = pl.program_id(0)
        hb = pl.program_id(1)

        # ---- once per image block: zero only the halo strips, then DMA the
        #      images straight from HBM into the aligned interior.
        @pl.when(hb == 0)
        def _():
            xpad_ref[:, 0:LPAD] = jnp.zeros((NB * Cin_p, LPAD), cdt)
            xpad_ref[:, LPAD + HW:SCRATCH_L] = jnp.zeros((NB * Cin_p, RHALO), cdt)
            cp = pltpu.make_async_copy(
                x_hbm.at[pl.ds(nb * (NB * Cin_p), NB * Cin_p)],
                xpad_ref.at[:, LPAD:LPAD + HW],
                dma_sem.at[0])
            cp.start()
            cp.wait()
            # TODO(synk): double-buffer xpad and prefetch image block nb+1
            # during the last band of block nb to hide this DMA.

        band_base = hb * PB
        if lane_aligned:
            band_base = pl.multiple_of(band_base, 128)

        # column masks for dx = +/-1 (top/bottom padding comes from the halo);
        # broadcasts hoisted out of the tap/image loops.
        xcol = jax.lax.broadcasted_iota(jnp.int32, (1, PB), 1) % W
        ok_left = jnp.broadcast_to(xcol >= 1, (Cin_p, PB))
        ok_right = jnp.broadcast_to(xcol <= W - 2, (Cin_p, PB))

        # hoisted ActNorm broadcasts: scale = exp(logs), shift = bias*scale
        scale_b = jnp.broadcast_to(scale_ref[...], (Cout_p, PB))
        shift_b = jnp.broadcast_to(shift_ref[...], (Cout_p, PB))

        for b in range(NB):                       # static unroll over images
            # one aligned window load of this image's band (+ halo)
            win = xpad_ref[b * Cin_p:(b + 1) * Cin_p, pl.ds(band_base, WINL)]

            pieces = []
            for dy in (-1, 0, 1):
                for dx in (-1, 0, 1):
                    o = LPAD + dy * W + dx        # static, inside the window
                    piece = win[:, o:o + PB]      # (Cin_p, PB)
                    if dx == -1:
                        piece = jnp.where(ok_left, piece, 0)
                    elif dx == 1:
                        piece = jnp.where(ok_right, piece, 0)
                    pieces.append(piece)

            if fold_taps:
                patches = jnp.concatenate(pieces, axis=0)       # (9*Cin_p, PB)
                acc = jnp.dot(w_ref[...], patches,
                              preferred_element_type=jnp.float32)
            else:
                acc = jnp.dot(w_ref[0], pieces[0],
                              preferred_element_type=jnp.float32)
                for t in range(1, KH * KW):
                    acc = acc + jnp.dot(w_ref[t], pieces[t],
                                        preferred_element_type=jnp.float32)

            # ActNorm epilogue in f32; lane-dense store
            o_ref[b] = (acc * scale_b + shift_b).astype(o_ref.dtype)

    # ---------------- wrapper-side prep (XLA fuses pad + cast) ----------------
    x_flat = x_nchw.reshape(N, Cin, HW)
    if Cin_p != Cin:
        x_flat = jnp.pad(x_flat, ((0, 0), (0, Cin_p - Cin), (0, 0)))
    x_flat = x_flat.astype(cdt).reshape(N * Cin_p, HW)     # flat rows for DMA

    w_p = weight_oihw.astype(jnp.float32)
    if Cin_p != Cin or Cout_p != Cout:
        w_p = jnp.pad(w_p, ((0, Cout_p - Cout), (0, Cin_p - Cin), (0, 0), (0, 0)))
    if fold_taps:
        # W2[co, (kh*KW + kw)*Cin_p + ci]
        w_arg = jnp.transpose(w_p, (0, 2, 3, 1)).reshape(Cout_p, KH * KW * Cin_p)
        w_spec = pl.BlockSpec((Cout_p, KH * KW * Cin_p), lambda nb, hb: (0, 0))
    else:
        # W3[kh*KW + kw, co, ci]
        w_arg = jnp.transpose(w_p, (2, 3, 0, 1)).reshape(KH * KW, Cout_p, Cin_p)
        w_spec = pl.BlockSpec((KH * KW, Cout_p, Cin_p), lambda nb, hb: (0, 0, 0))
    w_arg = w_arg.astype(cdt)

    # precomputed ActNorm params:  y = acc * exp(logs) + bias * exp(logs)
    scale = jnp.exp(jnp.asarray(logs, jnp.float32).reshape(-1))
    shift = jnp.asarray(bias, jnp.float32).reshape(-1) * scale
    if Cout_p != Cout:
        scale = jnp.pad(scale, (0, Cout_p - Cout))
        shift = jnp.pad(shift, (0, Cout_p - Cout))
    scale = scale.reshape(Cout_p, 1)
    shift = shift.reshape(Cout_p, 1)

    if vmem_limit_bytes is None:
        # safe on every generation (v7x has 64 MiB/TC); v5e/v6e could go higher
        vmem_limit_bytes = 48 * 1024 * 1024

    out_flat = pl.pallas_call(
        kernel,
        out_shape=jax.ShapeDtypeStruct((N, Cout_p, HW), jnp.float32),
        grid_spec=pltpu.PrefetchScalarGridSpec(
            num_scalar_prefetch=0,
            grid=(NBLK, HB),
            in_specs=[
                pl.BlockSpec(memory_space=pl.ANY),       # image stays in HBM
                w_spec,                                  # fetched once
                pl.BlockSpec((Cout_p, 1), lambda nb, hb: (0, 0)),
                pl.BlockSpec((Cout_p, 1), lambda nb, hb: (0, 0)),
            ],
            # lane-dense output block: minor dim PB is a multiple of 128
            out_specs=pl.BlockSpec((NB, Cout_p, PB), lambda nb, hb: (nb, 0, hb)),
            scratch_shapes=[
                pltpu.VMEM((NB * Cin_p, SCRATCH_L), cdt),   # zero-haloed images
                pltpu.SemaphoreType.DMA((1,)),
            ],
        ),
        compiler_params=pltpu.CompilerParams(
            # batch-block axis -> megacore; band axis sequential because the
            # padded-image scratch is carried across bands of one block.
            dimension_semantics=("parallel", "arbitrary"),
            vmem_limit_bytes=vmem_limit_bytes,
        ),
    )(x_flat, w_arg, scale, shift)

    return out_flat[:, :Cout, :].reshape(N, Cout, H, W)


def _reference(x_nchw, weight_oihw, bias, logs):
    """Pure-JAX reference (lax conv) for correctness checks."""
    y = jax.lax.conv_general_dilated(
        x_nchw, weight_oihw, window_strides=(1, 1), padding="SAME",
        dimension_numbers=("NCHW", "OIHW", "NCHW"))
    y = (y + jnp.reshape(bias, (1, -1, 1, 1))) * jnp.exp(jnp.reshape(logs, (1, -1, 1, 1)))
    return y


if __name__ == "__main__":
    # Small shapes consistent with the module: batch=2, in_channels=4,
    # out_channels=8, spatial=16x16.
    N, Cin, Cout, H, W = 2, 4, 8, 16, 16

    key = jax.random.PRNGKey(0)
    kx, kw, kb, kl = jax.random.split(key, 4)
    x = jax.random.normal(kx, (N, Cin, H, W), dtype=jnp.float32)
    # Deterministic parameter init matching the module's __init__ (std=0.05).
    w_oihw = 0.05 * jax.random.normal(kw, (Cout, Cin, KH, KW), dtype=jnp.float32)
    an_bias = 0.05 * jax.random.normal(kb, (Cout,), dtype=jnp.float32)
    an_logs = 0.05 * jax.random.normal(kl, (Cout,), dtype=jnp.float32)

    ref = jax.block_until_ready(_reference(x, w_oihw, an_bias, an_logs))

    # f32, folded-K GEMM, 2 bands x per-image grid: exercises the halo init,
    # the HBM->scratch DMA, the band carry, and the parallel batch axis.
    out_a = jax.block_until_ready(
        conv2d_normy(x, w_oihw, an_bias, an_logs, compute_dtype=jnp.float32,
                     band_rows=8, batch_block=1, fold_taps=True))
    assert out_a.shape == (N, Cout, H, W)
    assert jnp.allclose(out_a, ref, atol=1e-4, rtol=1e-4), "f32 folded mismatch"

    # f32, per-tap accumulating GEMMs (large-Cin path), whole image per band,
    # both images packed into a single grid step.
    out_b = jax.block_until_ready(
        conv2d_normy(x, w_oihw, an_bias, an_logs, compute_dtype=jnp.float32,
                     fold_taps=False))
    assert out_b.shape == (N, Cout, H, W)
    assert jnp.allclose(out_b, ref, atol=1e-4, rtol=1e-4), "f32 per-tap mismatch"

    # Default config: bf16 in HBM/scratch/MXU on v6e/v7x, all-f32 on v5e-.
    out_c = jax.block_until_ready(conv2d_normy(x, w_oihw, an_bias, an_logs))
    assert out_c.shape == (N, Cout, H, W)
    assert jnp.allclose(out_c, ref, atol=3e-2, rtol=3e-2), "default-dtype mismatch"

    print("KERNEL_OK")
</pallas_src>

<mosaic_0001>
module attributes {stable_mosaic.version = 11 : i64} {
  func.func @kernel(%arg0: i32, %arg1: i32, %arg2: memref<16x256xf32, #tpu.memory_space<any>>, %arg3: memref<8x72xf32, #tpu.memory_space<vmem>>, %arg4: memref<8x1xf32, #tpu.memory_space<vmem>>, %arg5: memref<8x1xf32, #tpu.memory_space<vmem>>, %arg6: memref<1x8x128xf32, #tpu.memory_space<vmem>>, %arg7: memref<8x512xf32, #tpu.memory_space<vmem>>, %arg8: memref<1x!tpu.dma_semaphore, #tpu.memory_space<semaphore_mem>>) attributes {dimension_semantics = [#tpu.dimension_semantics<parallel>, #tpu.dimension_semantics<arbitrary>], iteration_bounds = array<i64: 2, 2>, scalar_prefetch = 0 : i64, scratch_operands = 2 : i64, tpu.core_type = #tpu.core_type<tc>, window_params = [{}, {pipeline_mode = #tpu.pipeline_mode<synchronous>, transform_indices = @transform_1, window_bounds = array<i64: 8, 72>}, {pipeline_mode = #tpu.pipeline_mode<synchronous>, transform_indices = @transform_2, window_bounds = array<i64: 8, 1>}, {pipeline_mode = #tpu.pipeline_mode<synchronous>, transform_indices = @transform_3, window_bounds = array<i64: 8, 1>}, {transform_indices = @transform_4, window_bounds = array<i64: 1, 8, 128>}]} {
    %c0_i32 = arith.constant 0 : i32
    %0 = arith.cmpi eq, %arg1, %c0_i32 : i32
    %1 = arith.extui %0 : i1 to i32
    %c0_i32_0 = arith.constant 0 : i32
    %2 = arith.cmpi ne, %1, %c0_i32_0 : i32
    scf.if %2 {
      %cst_21 = arith.constant 0.000000e+00 : f32
      %73 = vector.broadcast %cst_21 : f32 to vector<8x128xf32>
      %c0_22 = arith.constant 0 : index
      %c0_23 = arith.constant 0 : index
      %74 = vector.load %arg7[%c0_22, %c0_23] : memref<8x512xf32, #tpu.memory_space<vmem>>, vector<8x128xf32>
      tpu.vector_store %arg7[%c0_22, %c0_23], %73 {strides = array<i32>} : memref<8x512xf32, #tpu.memory_space<vmem>>, vector<8x128xf32>,
      %cst_24 = arith.constant 0.000000e+00 : f32
      %75 = vector.broadcast %cst_24 : f32 to vector<8x128xf32>
      %c0_25 = arith.constant 0 : index
      %c384 = arith.constant 384 : index
      %76 = vector.load %arg7[%c0_25, %c384] : memref<8x512xf32, #tpu.memory_space<vmem>>, vector<8x128xf32>
      tpu.vector_store %arg7[%c0_25, %c384], %75 {strides = array<i32>} : memref<8x512xf32, #tpu.memory_space<vmem>>, vector<8x128xf32>,
      %c8_i32 = arith.constant 8 : i32
      %77 = arith.muli %arg0, %c8_i32 : i32
      %c0_i32_26 = arith.constant 0 : i32
      %c0_i32_27 = arith.constant 0 : i32
      %78 = tpu.memref_slice %arg2[%77, %c0_i32_27] : memref<16x256xf32, #tpu.memory_space<any>> -> memref<8x256xf32, #tpu.memory_space<any>>
      %c0_i32_28 = arith.constant 0 : i32
      %c128_i32_29 = arith.constant 128 : i32
      %79 = tpu.memref_slice %arg7[%c0_i32_28, %c128_i32_29] : memref<8x512xf32, #tpu.memory_space<vmem>> -> memref<8x256xf32, #tpu.memory_space<vmem>>
      %80 = tpu.memref_slice %arg8[%c0_i32_26] : memref<1x!tpu.dma_semaphore, #tpu.memory_space<semaphore_mem>> -> memref<1x!tpu.dma_semaphore, #tpu.memory_space<semaphore_mem>>
      %81 = tpu.memref_squeeze %80 : memref<1x!tpu.dma_semaphore, #tpu.memory_space<semaphore_mem>> -> memref<!tpu.dma_semaphore, #tpu.memory_space<semaphore_mem>>
      tpu.enqueue_dma source(%78 : memref<8x256xf32, #tpu.memory_space<any>>) target(%79 : memref<8x256xf32, #tpu.memory_space<vmem>>) target_semaphore(%81 : memref<!tpu.dma_semaphore, #tpu.memory_space<semaphore_mem>>)
      %c0_i32_30 = arith.constant 0 : i32
      %c0_i32_31 = arith.constant 0 : i32
      %82 = tpu.memref_slice %arg2[%77, %c0_i32_31] : memref<16x256xf32, #tpu.memory_space<any>> -> memref<8x256xf32, #tpu.memory_space<any>>
      %c0_i32_32 = arith.constant 0 : i32
      %c128_i32_33 = arith.constant 128 : i32
      %83 = tpu.memref_slice %arg7[%c0_i32_32, %c128_i32_33] : memref<8x512xf32, #tpu.memory_space<vmem>> -> memref<8x256xf32, #tpu.memory_space<vmem>>
      %84 = tpu.memref_slice %arg8[%c0_i32_30] : memref<1x!tpu.dma_semaphore, #tpu.memory_space<semaphore_mem>> -> memref<1x!tpu.dma_semaphore, #tpu.memory_space<semaphore_mem>>
      %85 = tpu.memref_squeeze %84 : memref<1x!tpu.dma_semaphore, #tpu.memory_space<semaphore_mem>> -> memref<!tpu.dma_semaphore, #tpu.memory_space<semaphore_mem>>
      tpu.wait_dma2 semaphore(%85 : memref<!tpu.dma_semaphore, #tpu.memory_space<semaphore_mem>>) src(%82 : memref<8x256xf32, #tpu.memory_space<any>>) dst(%83 : memref<8x256xf32, #tpu.memory_space<vmem>>)
    } else {
    }
    %c128_i32 = arith.constant 128 : i32
    %3 = arith.muli %arg1, %c128_i32 : i32
    %4 = tpu.assume_multiple %3, 128 : i32
    %5 = tpu.iota {dimensions = array<i32: 1>} : vector<1x128xi32>
    %c16_i32 = arith.constant 16 : i32
    %c0_i32_1 = arith.constant 0 : i32
    %6 = arith.cmpi eq, %c16_i32, %c0_i32_1 : i32
    %c1_i32 = arith.constant 1 : i32
    %7 = arith.select %6, %c1_i32, %c16_i32 : i32
    %8 = vector.broadcast %7 : i32 to vector<1x128xi32>
    %9 = arith.remsi %5, %8 : vector<1x128xi32>
    %c0_i32_2 = arith.constant 0 : i32
    %10 = vector.broadcast %c0_i32_2 : i32 to vector<1x128xi32>
    %11 = arith.cmpi ne, %9, %10 : vector<1x128xi32>
    %c0_i32_3 = arith.constant 0 : i32
    %12 = vector.broadcast %c0_i32_3 : i32 to vector<1x128xi32>
    %13 = arith.cmpi slt, %9, %12 : vector<1x128xi32>
    %c0_i32_4 = arith.constant 0 : i32
    %14 = arith.cmpi slt, %7, %c0_i32_4 : i32
    %15 = vector.broadcast %14 : i1 to vector<1x128xi1>
    %16 = vector.broadcast %15 : vector<1x128xi1> to vector<1x128xi1>
    %17 = arith.xori %13, %16 : vector<1x128xi1>
    %18 = arith.andi %17, %11 : vector<1x128xi1>
    %19 = vector.broadcast %7 : i32 to vector<1x128xi32>
    %20 = arith.addi %9, %19 : vector<1x128xi32>
    %21 = arith.select %18, %20, %9 : vector<1x128xi1>, vector<1x128xi32>
    %c1_i32_5 = arith.constant 1 : i32
    %22 = vector.broadcast %c1_i32_5 : i32 to vector<1x128xi32>
    %23 = arith.cmpi sge, %21, %22 : vector<1x128xi32>
    %24 = vector.shape_cast %23 : vector<1x128xi1> to vector<1x128xi1>
    %25 = vector.broadcast %24 : vector<1x128xi1> to vector<8x128xi1>
    %c14_i32 = arith.constant 14 : i32
    %26 = vector.broadcast %c14_i32 : i32 to vector<1x128xi32>
    %27 = arith.cmpi sle, %21, %26 : vector<1x128xi32>
    %28 = vector.shape_cast %27 : vector<1x128xi1> to vector<1x128xi1>
    %29 = vector.broadcast %28 : vector<1x128xi1> to vector<8x128xi1>
    %c0 = arith.constant 0 : index
    %c0_6 = arith.constant 0 : index
    %30 = vector.load %arg4[%c0, %c0_6] : memref<8x1xf32, #tpu.memory_space<vmem>>, vector<8x1xf32>
    %31 = vector.shape_cast %30 : vector<8x1xf32> to vector<8x1xf32>
    %32 = vector.broadcast %31 : vector<8x1xf32> to vector<8x128xf32>
    %c0_7 = arith.constant 0 : index
    %c0_8 = arith.constant 0 : index
    %33 = vector.load %arg5[%c0_7, %c0_8] : memref<8x1xf32, #tpu.memory_space<vmem>>, vector<8x1xf32>
    %34 = vector.shape_cast %33 : vector<8x1xf32> to vector<8x1xf32>
    %35 = vector.broadcast %34 : vector<8x1xf32> to vector<8x128xf32>
    %c0_9 = arith.constant 0 : index
    %36 = arith.index_cast %4 : i32 to index
    %37 = vector.load %arg7[%c0_9, %36] : memref<8x512xf32, #tpu.memory_space<vmem>>, vector<8x384xf32>
    %38 = vector.extract_strided_slice %37 {offsets = [0, 111], sizes = [8, 128], strides = [1, 1]} : vector<8x384xf32> to vector<8x128xf32>
    %c0_i32_10 = arith.constant 0 : i32
    %39 = arith.sitofp %c0_i32_10 : i32 to f32
    %40 = vector.broadcast %39 : f32 to vector<8x128xf32>
    %41 = arith.select %25, %38, %40 : vector<8x128xi1>, vector<8x128xf32>
    %42 = vector.extract_strided_slice %37 {offsets = [0, 112], sizes = [8, 128], strides = [1, 1]} : vector<8x384xf32> to vector<8x128xf32>
    %43 = vector.extract_strided_slice %37 {offsets = [0, 113], sizes = [8, 128], strides = [1, 1]} : vector<8x384xf32> to vector<8x128xf32>
    %c0_i32_11 = arith.constant 0 : i32
    %44 = arith.sitofp %c0_i32_11 : i32 to f32
    %45 = vector.broadcast %44 : f32 to vector<8x128xf32>
    %46 = arith.select %29, %43, %45 : vector<8x128xi1>, vector<8x128xf32>
    %47 = vector.extract_strided_slice %37 {offsets = [0, 127], sizes = [8, 128], strides = [1, 1]} : vector<8x384xf32> to vector<8x128xf32>
    %c0_i32_12 = arith.constant 0 : i32
    %48 = arith.sitofp %c0_i32_12 : i32 to f32
    %49 = vector.broadcast %48 : f32 to vector<8x128xf32>
    %50 = arith.select %25, %47, %49 : vector<8x128xi1>, vector<8x128xf32>
    %51 = vector.extract_strided_slice %37 {offsets = [0, 128], sizes = [8, 128], strides = [1, 1]} : vector<8x384xf32> to vector<8x128xf32>
    %52 = vector.extract_strided_slice %37 {offsets = [0, 129], sizes = [8, 128], strides = [1, 1]} : vector<8x384xf32> to vector<8x128xf32>
    %c0_i32_13 = arith.constant 0 : i32
    %53 = arith.sitofp %c0_i32_13 : i32 to f32
    %54 = vector.broadcast %53 : f32 to vector<8x128xf32>
    %55 = arith.select %29, %52, %54 : vector<8x128xi1>, vector<8x128xf32>
    %56 = vector.extract_strided_slice %37 {offsets = [0, 143], sizes = [8, 128], strides = [1, 1]} : vector<8x384xf32> to vector<8x128xf32>
    %c0_i32_14 = arith.constant 0 : i32
    %57 = arith.sitofp %c0_i32_14 : i32 to f32
    %58 = vector.broadcast %57 : f32 to vector<8x128xf32>
    %59 = arith.select %25, %56, %58 : vector<8x128xi1>, vector<8x128xf32>
    %60 = vector.extract_strided_slice %37 {offsets = [0, 144], sizes = [8, 128], strides = [1, 1]} : vector<8x384xf32> to vector<8x128xf32>
    %61 = vector.extract_strided_slice %37 {offsets = [0, 145], sizes = [8, 128], strides = [1, 1]} : vector<8x384xf32> to vector<8x128xf32>
    %c0_i32_15 = arith.constant 0 : i32
    %62 = arith.sitofp %c0_i32_15 : i32 to f32
    %63 = vector.broadcast %62 : f32 to vector<8x128xf32>
    %64 = arith.select %29, %61, %63 : vector<8x128xi1>, vector<8x128xf32>
    %65 = tpu.concatenate %41, %42, %46, %50, %51, %55, %59, %60, %64 in 0 : vector<8x128xf32>, vector<8x128xf32>, vector<8x128xf32>, vector<8x128xf32>, vector<8x128xf32>, vector<8x128xf32>, vector<8x128xf32>, vector<8x128xf32>, vector<8x128xf32> -> vector<72x128xf32>
    %c0_16 = arith.constant 0 : index
    %c0_17 = arith.constant 0 : index
    %66 = vector.load %arg3[%c0_16, %c0_17] : memref<8x72xf32, #tpu.memory_space<vmem>>, vector<8x72xf32>
    %cst = arith.constant dense<0.000000e+00> : vector<8x128xf32>
    %67 = tpu.matmul %66, %65, %cst {dimension_numbers = #tpu.dot_dimension_numbers<[1], [0], [0], [1], [0, 0, 1, 1], [], []>} : vector<8x72xf32>, vector<72x128xf32>, vector<8x128xf32> -> vector<8x128xf32>
    %68 = arith.mulf %67, %32 : vector<8x128xf32>
    %69 = arith.addf %68, %35 : vector<8x128xf32>
    %c0_18 = arith.constant 0 : index
    %c0_19 = arith.constant 0 : index
    %c0_20 = arith.constant 0 : index
    %70 = vector.load %arg6[%c0_18, %c0_19, %c0_20] : memref<1x8x128xf32, #tpu.memory_space<vmem>>, vector<1x8x128xf32>
    %71 = vector.shape_cast %70 : vector<1x8x128xf32> to vector<8x128xf32>
    %72 = vector.shape_cast %69 : vector<8x128xf32> to vector<1x8x128xf32>
    tpu.vector_store %arg6[%c0_18, %c0_19, %c0_20], %72 {strides = array<i32>} : memref<1x8x128xf32, #tpu.memory_space<vmem>>, vector<1x8x128xf32>,
    return
  }
  func.func @transform_1(%arg0: i32, %arg1: i32) -> (i32, i32) {
    %c0_i32 = arith.constant 0 : i32
    %c0_i32_0 = arith.constant 0 : i32
    %c0_i32_1 = arith.constant 0 : i32
    return %c0_i32, %c0_i32_0 : i32, i32
  }
  func.func @transform_2(%arg0: i32, %arg1: i32) -> (i32, i32) {
    %c0_i32 = arith.constant 0 : i32
    %c0_i32_0 = arith.constant 0 : i32
    %c0_i32_1 = arith.constant 0 : i32
    return %c0_i32, %c0_i32_0 : i32, i32
  }
  func.func @transform_3(%arg0: i32, %arg1: i32) -> (i32, i32) {
    %c0_i32 = arith.constant 0 : i32
    %c0_i32_0 = arith.constant 0 : i32
    %c0_i32_1 = arith.constant 0 : i32
    return %c0_i32, %c0_i32_0 : i32, i32
  }
  func.func @transform_4(%arg0: i32, %arg1: i32) -> (i32, i32, i32) {
    %c0_i32 = arith.constant 0 : i32
    %c0_i32_0 = arith.constant 0 : i32
    return %arg0, %c0_i32, %arg1 : i32, i32, i32
  }
}

</mosaic_0001>

<llo_original>
// kernel: tpu_custom_call.1
$region0: #{tpu_custom_call.1}
  #allocation0 [shape = 'u32[]', space=smem, size = 0x4, offset = 0x4, fixed_abs, tag = 'smem constant byte address 0x4 - core index']
  #allocation1 [shape = 'u32[144,128]{1,0:T(1,128)}', space=vmem, size = 0x12000, scoped, tag = 'internal scratch']
  #allocation2 [shape = 'f32[8,512]{1,0:T(8,128)}', space=vmem, size = 0x4000, scoped, tag = 'scratch operand']
  #allocation3 [shape = 's32[1]{0}', space=sflag, size = 0x4, scoped, tag = 'scratch operand']
  #allocation6 [shape = 's32[]', space=sflag, size = 0x4, offset = 0, fixed_abs, tag = 'sflag constant byte address 0x0 - dummy sync flag']
  #allocation7 [shape = 's32[]', space=sflag, size = 0x4, offset = 0, fixed_abs, tag = 'sflag constant byte address 0x0 - dummy sync flag']
  #allocation8 [shape = 'u32[]', space=smem, size = 0x4, offset = 0x44, fixed_abs, tag = 'smem constant byte address 0x44 - assertion arg 0']
  #allocation9 [shape = 'u32[]', space=smem, size = 0x4, offset = 0x48, fixed_abs, tag = 'smem constant byte address 0x48 - assertion arg 1']
  %s0 = inlined_call_operand.hbm [shape: f32[16,256], index: 0, kind: input, shape index: {}]
  %s1 = inlined_call_operand.vmem [shape: f32[8,72], index: 1, kind: input, shape index: {}]
  %s2 = inlined_call_operand.vmem [shape: f32[8,1], index: 2, kind: input, shape index: {}]
  %s3 = inlined_call_operand.vmem [shape: f32[8,1], index: 3, kind: input, shape index: {}]
  %s4 = inlined_call_operand.hbm [shape: f32[2,8,256], index: 4, kind: output, shape index: {}]
  %s5 = sld [smem:[#allocation0]]
  $region53: #{tpu_custom_call.1} parent=0
    _
  %s7 = ssub.s32 1, %s5
  %s8 = scalar_select 0, %s7, %s5
  $region1: #{tpu_custom_call.1} parent=0
    #allocation4 [shape = 'u8[8192]{0}', space=vmem, size = 0x2000, scoped, tag = 'output window, operand 0']
    #allocation5 [shape = 's32[2]{0}', space=sflag, size = 0x8, scoped, tag = 'scoped memory for tpu_custom_call.1']
    %9 = vsyncpa [#allocation5], 0
    %s10 = scalar_lea.sflag [#allocation5], 1
    %11 = vsyncpa %s10, 0
    loop: start=0, step=1, limit=6
    $region2: #{tpu_custom_call.1} parent=1 // loop_pre_header
      _
    $region3: #{tpu_custom_call.1} parent=1 // loop_header
      %s13 = sphi 0, %s17
      %p14 = scmp.ge.s32.totalorder %s13, 6
      %s20 = sphi 0, %s32
      %s21 = sphi 0, %s28
      %s22 = sphi 0, %s20
      %s23 = sphi 0, %s21
      %s24 = sphi 0, %s22
      %s25 = sphi 0, %s23
      %s33 = sphi 0, %s33
      %s35 = sphi 0, %s33
      %s36 = sphi 0, %s35
      %s50 = sphi 0, %s36
      %s54 = sphi 0, %s54
      %s56 = sphi 0, %s54
      %s57 = sphi 0, %s56
      %s71 = sphi 0, %s57
      %s75 = sphi 0, %s75
      %s77 = sphi 0, %s75
      %s78 = sphi 0, %s77
      %s92 = sphi 0, %s78
      %s100 = sphi 0, %s102
      %s103 = sphi 0, %s100
      %s104 = sphi 0, %s103
      %s120 = sphi 0, %s104
    $region4: #{tpu_custom_call.1} parent=1 // loop_header_branch
      %16 = sbr.rel (%p14) target = $region8
    $region5: #{tpu_custom_call.1} parent=1 // loop_body
      %s18 = ssub.s32 %s13, 1
      %s19 = ssub.s32 %s13, 2
      %s26 = sadd.s32 1, %s21
      %p27 = scmp.ge.s32.totalorder %s26, 2
      %s28 = scalar_select %p27, 0, %s26
      %s29 = sadd.s32 1, %s20
      %s30 = scalar_select %p27, %s29, %s20
      %p31 = scmp.ge.s32.totalorder %s30, 2
      %s32 = scalar_select %p31, 0, %s30
      %s34 = sadd.s32 %s33, 1
      %p37 = scmp.eq.s32.totalorder %s13, 3
      %p38 = scmp.ne.s32.totalorder %s33, %s35
      %p39 = scmp.eq.s32.totalorder %s13, 0
      %p40 = por %p38, %p39
      %p41 = scmp.ne.s32.totalorder %s33, %s35
      %p42 = scmp.eq.s32.totalorder %s18, 3
      %p43 = por %p41, %p42
      %p44 = scmp.ne.s32.totalorder %s35, %s36
      %p45 = scmp.eq.s32.totalorder %s18, 0
      %p46 = por %p44, %p45
      %p47 = scmp.ne.s32.totalorder %s35, %s36
      %p48 = scmp.eq.s32.totalorder %s19, 3
      %p49 = por %p47, %p48
      %p51 = scmp.ne.s32.totalorder %s36, %s50
      %p52 = scmp.eq.s32.totalorder %s19, 0
      %p53 = por %p51, %p52
      %s55 = sadd.s32 %s54, 1
      %p58 = scmp.eq.s32.totalorder %s13, 3
      %p59 = scmp.ne.s32.totalorder %s54, %s56
      %p60 = scmp.eq.s32.totalorder %s13, 0
      %p61 = por %p59, %p60
      %p62 = scmp.ne.s32.totalorder %s54, %s56
      %p63 = scmp.eq.s32.totalorder %s18, 3
      %p64 = por %p62, %p63
      %p65 = scmp.ne.s32.totalorder %s56, %s57
      %p66 = scmp.eq.s32.totalorder %s18, 0
      %p67 = por %p65, %p66
      %p68 = scmp.ne.s32.totalorder %s56, %s57
      %p69 = scmp.eq.s32.totalorder %s19, 3
      %p70 = por %p68, %p69
      %p72 = scmp.ne.s32.totalorder %s57, %s71
      %p73 = scmp.eq.s32.totalorder %s19, 0
      %p74 = por %p72, %p73
      %s76 = sadd.s32 %s75, 1
      %p79 = scmp.eq.s32.totalorder %s13, 3
      %p80 = scmp.ne.s32.totalorder %s75, %s77
      %p81 = scmp.eq.s32.totalorder %s13, 0
      %p82 = por %p80, %p81
      %p83 = scmp.ne.s32.totalorder %s75, %s77
      %p84 = scmp.eq.s32.totalorder %s18, 3
      %p85 = por %p83, %p84
      %p86 = scmp.ne.s32.totalorder %s77, %s78
      %p87 = scmp.eq.s32.totalorder %s18, 0
      %p88 = por %p86, %p87
      %p89 = scmp.ne.s32.totalorder %s77, %s78
      %p90 = scmp.eq.s32.totalorder %s19, 3
      %p91 = por %p89, %p90
      %p93 = scmp.ne.s32.totalorder %s78, %s92
      %p94 = scmp.eq.s32.totalorder %s19, 0
      %p95 = por %p93, %p94
      %s96 = ssub.s32 %s20, %s32
      %s97 = ssub.s32 %s21, %s28
      %s98 = sor.u32 %s96, %s97
      %p99 = scmp.eq.s32.totalorder %s98, 0
      %s101 = sadd.s32 %s100, 1
      %s102 = scalar_select %p99, %s100, %s101
      %p105 = pneg %p99
      %p106 = scmp.eq.s32.totalorder %s13, 3
      %p107 = por %p105, %p106
      %p108 = scmp.ne.s32.totalorder %s100, %s103
      %p109 = scmp.eq.s32.totalorder %s13, 0
      %p110 = por %p108, %p109
      %p111 = scmp.ne.s32.totalorder %s100, %s103
      %p112 = scmp.eq.s32.totalorder %s18, 3
      %p113 = por %p111, %p112
      %p114 = scmp.ne.s32.totalorder %s103, %s104
      %p115 = scmp.eq.s32.totalorder %s18, 0
      %p116 = por %p114, %p115
      %p117 = scmp.ne.s32.totalorder %s103, %s104
      %p118 = scmp.eq.s32.totalorder %s19, 3
      %p119 = por %p117, %p118
      %p121 = scmp.ne.s32.totalorder %s104, %s120
      %p122 = scmp.eq.s32.totalorder %s19, 0
      %p123 = por %p121, %p122
      %p124 = scmp.le.s32.totalorder 1, %s13
      %p125 = scmp.lt.s32.totalorder %s13, 5
      %p126 = pnand %p124, %p125
      %p127 = pneg %p126
      // Predicated region
      $region9: #{tpu_custom_call.1} parent=5 // pred_check
        _
      $region10: #{tpu_custom_call.1} parent=5 // pred_check_branch
        %129 = sbr.rel (%p126) target = $region12
      $region11: #{tpu_custom_call.1} parent=5 // pred_region
        %s130 = ssub.s32 %s13, 1
        // Predicated region
        $region13: #{tpu_custom_call.1} parent=11 // pred_check
          %p131 = pneg %p46
        $region14: #{tpu_custom_call.1} parent=11 // pred_check_branch
          %133 = sbr.rel (%p131) target = $region16
        $region15: #{tpu_custom_call.1} parent=11 // pred_region
          _
        $region16: #{tpu_custom_call.1} parent=11 // pred_fallthru
          _
        // Predicated region
        $region17: #{tpu_custom_call.1} parent=11 // pred_check
          %p134 = pneg %p67
        $region18: #{tpu_custom_call.1} parent=11 // pred_check_branch
          %136 = sbr.rel (%p134) target = $region20
        $region19: #{tpu_custom_call.1} parent=11 // pred_region
          _
        $region20: #{tpu_custom_call.1} parent=11 // pred_fallthru
          _
        // Predicated region
        $region21: #{tpu_custom_call.1} parent=11 // pred_check
          %p137 = pneg %p88
        $region22: #{tpu_custom_call.1} parent=11 // pred_check_branch
          %139 = sbr.rel (%p137) target = $region24
        $region23: #{tpu_custom_call.1} parent=11 // pred_region
          _
        $region24: #{tpu_custom_call.1} parent=11 // pred_fallthru
          _
      $region12: #{tpu_custom_call.1} parent=5 // pred_fallthru
        _
      %p140 = scmp.lt.s32.totalorder %s13, 4
      // Predicated region
      $region25: #{tpu_custom_call.1} parent=5 // pred_check
        %p141 = pneg %p140
      $region26: #{tpu_custom_call.1} parent=5 // pred_check_branch
        %143 = sbr.rel (%p141) target = $region28
      $region27: #{tpu_custom_call.1} parent=5 // pred_region
        _
      $region28: #{tpu_custom_call.1} parent=5 // pred_fallthru
        _
      %p144 = scmp.le.s32.totalorder 1, %s13
      %p145 = scmp.lt.s32.totalorder %s13, 5
      %p146 = pnand %p144, %p145
      %p147 = pneg %p146
      // Predicated region
      $region29: #{tpu_custom_call.1} parent=5 // pred_check
        _
      $region30: #{tpu_custom_call.1} parent=5 // pred_check_branch
        %149 = sbr.rel (%p146) target = $region32
      $region31: #{tpu_custom_call.1} parent=5 // pred_region
        %s150 = ssub.s32 %s13, 1
        %p151 = pneg %p46
        %p152 = pneg %p43
        %p153 = pneg %p67
        %p154 = pneg %p64
        %p155 = pneg %p88
        %p156 = pneg %p85
        %p157 = pneg %p116
        %p158 = pneg %p113
        %s159 = sand.u32 %s103, 1
        %s160 = scalar_lea.sflag [#allocation5], %s159
        %s161 = sand.u32 %s103, 1
        %s162 = smul.addr %s161, 8
        %s163 = scalar_lea.vmem [#allocation4], %s162
        %p164 = scmp.eq.s32.totalorder %s23, 0
        // Predicated region
        $region33: #{tpu_custom_call.1} parent=31 // pred_check
          %p165 = pneg %p164
        $region34: #{tpu_custom_call.1} parent=31 // pred_check_branch
          %167 = sbr.rel (%p165) target = $region36
        $region35: #{tpu_custom_call.1} parent=31 // pred_region
          %168 = vst [vmem:[#allocation2] sm:$0xff] 0.0
          %169 = vst [vmem:[#allocation2 + $0x18] sm:$0xff] 0.0
          %s170 = smul.u32 %s22, 8
          %s171 = sshra.s32 %s170, 3
          %s172 = sand.u32 %s170, 7
          %s173 = smul.u32 %s171, 2
          %s174 = smul.addr %s173, 128
          %s175 = scalar_lea.hbm %s0, %s174
          %s176 = scalar_lea.vmem [#allocation2], 8
          // Predicated region
          $region37: #{tpu_custom_call.1} parent=35 // pred_check
            _
          $region38: #{tpu_custom_call.1} parent=35 // pred_check_branch
            %178 = sbr.rel target = $region40
          $region39: #{tpu_custom_call.1} parent=35 // pred_region
            %179 = sst [smem:[#allocation8]] [#allocation7]
            %180 = sst [smem:[#allocation9]] [#allocation6]
          $region40: #{tpu_custom_call.1} parent=35 // pred_fallthru
            _
          %182 = shalt.err (0)
          %s184 = sshll.u32 %s176, 4
          %s185 = int_to_ptr.vmem [resolvable:$true] %s184
          %187 = dma.hbm_to_vmem [thread:$0]  %s175, 256, %s185, [#allocation3]
          %s188 = smul.u32 8, 1
          %s189 = smul.u32 %s188, 2
          %s190 = sshll.u32 %s189, 4
          %191 = dma.done [#allocation3], %s190
        $region36: #{tpu_custom_call.1} parent=31 // pred_fallthru
          _
        %s192 = smul.u32 %s23, 128
        %v193 = vlaneseq
        %v194 = vand.u32 %v193, 127
        %vm195 = vcmp.lt.s32.totalorder %v194, 0
        %v196 = vsub.s32 0, %v194
        %v197 = vsel %vm195, %v196, %v194
        %v198 = vshrl.u32 %v197, 4
        %v199 = vand.u32 %v197, 15
        %v200 = vsub.s32 0, %v199
        %v201 = vsel %vm195, %v200, %v199
        %vm202 = vcmp.ne.s32.totalorder %v201, 0
        %vm203 = vcmp.lt.s32.totalorder %v201, 0
        %vm204 = vmand %vm203, %vm202
        %v205 = vadd.s32 %v201, 16
        %v206 = vsel %vm204, %v205, %v201
        %vm207 = vcmp.ge.s32.totalorder %v206, 1
        %v208 = vsel %vm207, 1, 0
        %vm209 = vcmp.eq.s32.totalorder %v208, 1
        %vm210 = vcmp.le.s32.totalorder %v206, 14
        %v211 = vsel %vm210, 1, 0
        %vm212 = vcmp.eq.s32.totalorder %v211, 1
        %v213 = vld [vmem:[%s2] sm:$0xff]
        %215 = vset.pattern.permute.xlu0 0
        %216 = vperm.xlu0 %215, %v213
        %v217 = vpop.permute.xlu0 %216
        %v219 = vld [vmem:[%s3] sm:$0xff]
        %221 = vset.pattern.permute.xlu0 0
        %222 = vperm.xlu0 %221, %v219
        %v223 = vpop.permute.xlu0 %222
        %s225 = sshra.s32 %s192, 7
        %s226 = sand.u32 %s192, 127
        %s227 = smul.addr %s225, 8
        %s228 = scalar_lea.vmem [#allocation2], %s227
        %v229 = vld [vmem:[%s228] sm:$0xff]
        %v230 = vld [vmem:[%s228 + $0x8] sm:$0xff]
        %v231 = vld [vmem:[%s228 + $0x10] sm:$0xff]
        %234 = vrot.lane.b32.xlu0 %v229, 17
        %v235 = vpop.permute.xlu0 %234
        %236 = vrot.lane.b32.xlu0 %v230, 17
        %v237 = vpop.permute.xlu0 %236
        %vm238 = vcmask 138240
        %v239 = vsel %vm238, %v235, %v237
        %v241 = vsel %vm209, %v239, 0.0
        %242 = vrot.lane.b32.xlu0 %v229, 15
        %v243 = vpop.permute.xlu0 %242
        %244 = vrot.lane.b32.xlu0 %v230, 15
        %v245 = vpop.permute.xlu0 %244
        %vm246 = vcmask 121856
        %v247 = vsel %vm246, %v243, %v245
        %v249 = vsel %vm212, %v247, 0.0
        %250 = vrot.lane.b32.xlu0 %v229, 1
        %v251 = vpop.permute.xlu0 %250
        %252 = vrot.lane.b32.xlu0 %v230, 1
        %v253 = vpop.permute.xlu0 %252
        %vm254 = vcmask 7168
        %v255 = vsel %vm254, %v251, %v253
        %v257 = vsel %vm209, %v255, 0.0
        %259 = vrot.lane.b32.xlu0 %v230, 127
        %v260 = vpop.permute.xlu0 %259
        %261 = vrot.lane.b32.xlu0 %v231, 127
        %v262 = vpop.permute.xlu0 %261
        %vm263 = vcmask 1039360
        %v264 = vsel %vm263, %v260, %v262
        %v266 = vsel %vm212, %v264, 0.0
        %267 = vrot.lane.b32.xlu0 %v230, 113
        %v268 = vpop.permute.xlu0 %267
        %269 = vrot.lane.b32.xlu0 %v231, 113
        %v270 = vpop.permute.xlu0 %269
        %vm271 = vcmask 924672
        %v272 = vsel %vm271, %v268, %v270
        %v274 = vsel %vm209, %v272, 0.0
        %275 = vrot.lane.b32.xlu0 %v230, 111
        %v276 = vpop.permute.xlu0 %275
        %277 = vrot.lane.b32.xlu0 %v231, 111
        %v278 = vpop.permute.xlu0 %277
        %vm279 = vcmask 908288
        %v280 = vsel %vm279, %v276, %v278
        %v282 = vsel %vm212, %v280, 0.0
        %283 = vrot.lane.b32.xlu0 %v229, 16
        %v284 = vpop.permute.xlu0 %283
        %285 = vrot.lane.b32.xlu0 %v230, 16
        %v286 = vpop.permute.xlu0 %285
        %vm287 = vcmask 130048
        %v288 = vsel %vm287, %v284, %v286
        %290 = vrot.lane.b32.xlu0 %v230, 112
        %v291 = vpop.permute.xlu0 %290
        %292 = vrot.lane.b32.xlu0 %v231, 112
        %v293 = vpop.permute.xlu0 %292
        %vm294 = vcmask 916480
        %v295 = vsel %vm294, %v291, %v293
        %v297 = vld [vmem:[%s1] sm:$0xff]
        %vm298 = vcmask 588800
        %v300 = vsel %vm298, %v297, 0
        %302 = vmatprep.subr.mxu0 0.0
        %303 = vmatpush1.msra.mxu0 0.0
        %304 = vmatprep.subr.mxu0 0.0
        %305 = vmatpush1.msra.mxu0 0.0
        %306 = vmatprep.subr.mxu0 0.0
        %307 = vmatpush1.msra.mxu0 0.0
        %308 = vmatprep.subr.mxu0 0.0
        %309 = vmatpush1.msra.mxu0 0.0
        %310 = vmatprep.subr.mxu0 0.0
        %311 = vmatpush1.msra.mxu0 0.0
        %312 = vmatprep.subr.mxu0 0.0
        %313 = vmatpush1.msra.mxu0 0.0
        %314 = vmatprep.subr.mxu0 0.0
        %315 = vmatpush1.msra.mxu0 0.0
        %316 = vmatprep.subr.mxu0 0.0
        %317 = vmatpush1.msra.mxu0 %v282
        %318 = vmatprep.subr.mxu0 0.0
        %319 = vmatpush1.msra.mxu0 %v295
        %320 = vmatprep.subr.mxu0 0.0
        %321 = vmatpush1.msra.mxu0 %v274
        %322 = vmatprep.subr.mxu0 0.0
        %323 = vmatpush1.msra.mxu0 %v266
        %324 = vmatprep.subr.mxu0 0.0
        %325 = vmatpush1.msra.mxu0 %v230
        %326 = vmatprep.subr.mxu0 0.0
        %327 = vmatpush1.msra.mxu0 %v257
        %328 = vmatprep.subr.mxu0 0.0
        %329 = vmatpush1.msra.mxu0 %v249
        %330 = vmatprep.subr.mxu0 0.0
        %331 = vmatpush1.msra.mxu0 %v288
        %332 = vmatprep.subr.mxu0 0.0
        %333 = vmatpush1.msra.mxu0 %v241
        %334 = vmatprep.subr.mxu0 0.0
        %335 = vmatpush2.msra.mxu0 0.0
        %336 = vmatprep.subr.mxu0 0.0
        %337 = vmatpush2.msra.mxu0 0.0
        %338 = vmatprep.subr.mxu0 0.0
        %339 = vmatpush2.msra.mxu0 0.0
        %340 = vmatprep.subr.mxu0 0.0
        %341 = vmatpush2.msra.mxu0 0.0
        %342 = vmatprep.subr.mxu0 0.0
        %343 = vmatpush2.msra.mxu0 0.0
        %344 = vmatprep.subr.mxu0 0.0
        %345 = vmatpush2.msra.mxu0 0.0
        %346 = vmatprep.subr.mxu0 0.0
        %347 = vmatpush2.msra.mxu0 0.0
        %348 = vmatprep.subr.mxu0 0.0
        %349 = vmatpush2.msra.mxu0 0.0
        %350 = vmatprep.subr.mxu0 0.0
        %351 = vmatpush2.msra.mxu0 0.0
        %352 = vmatprep.subr.mxu0 0.0
        %353 = vmatpush2.msra.mxu0 0.0
        %354 = vmatprep.subr.mxu0 0.0
        %355 = vmatpush2.msra.mxu0 0.0
        %356 = vmatprep.subr.mxu0 0.0
        %357 = vmatpush2.msra.mxu0 0.0
        %358 = vmatprep.subr.mxu0 0.0
        %359 = vmatpush2.msra.mxu0 0.0
        %360 = vmatprep.subr.mxu0 0.0
        %361 = vmatpush2.msra.mxu0 0.0
        %362 = vmatprep.subr.mxu0 0.0
        %363 = vmatpush2.msra.mxu0 0.0
        %364 = vmatprep.subr.mxu0 0.0
        %365 = vmatpush2.msra.mxu0 0.0
        %366 = vmatprep.mubr.f32.mxu0 0.0
        %367 = vmatmul.mubr.f32.gmra.mxu0 %v300
        %v368 = vpop.f32.mrf.mxu0
        %v369 = vadd.f32 0.0, %v368
        %v370 = vpop.f32.mrf.mxu0
        %371 = vdwg.mxu0
        %v372 = vmul.f32 %v369, %v217
        %v373 = vadd.f32 %v372, %v223
        %374 = vst [vmem:[%s163] sm:$0xff] %v373
        %s375 = sand.u32 %s103, 1
        %s376 = scalar_lea.sflag [#allocation5], %s375
        %s377 = sand.u32 %s103, 1
        %s378 = smul.addr %s377, 8
        %s379 = scalar_lea.vmem [#allocation4], %s378
        // Predicated region
        $region41: #{tpu_custom_call.1} parent=31 // pred_check
          %p380 = pneg %p113
        $region42: #{tpu_custom_call.1} parent=31 // pred_check_branch
          %382 = sbr.rel (%p380) target = $region44
        $region43: #{tpu_custom_call.1} parent=31 // pred_region
          %s384 = ssub.s32 128, 128
          %385 = vsyncadd %s376, %s384
          %s386 = smul.addr %s22, 2
          %s387 = sadd.s32 %s23, %s386
          %s388 = smul.addr %s387, 128
          %s389 = scalar_lea.hbm %s4, %s388
          %s391 = sshll.u32 %s379, 4
          %s392 = int_to_ptr.vmem [resolvable:$true] %s391
          %394 = dma.vmem_to_hbm [thread:$0]  %s392, 128, %s389, %s376
        $region44: #{tpu_custom_call.1} parent=31 // pred_fallthru
          _
      $region32: #{tpu_custom_call.1} parent=5 // pred_fallthru
        _
      %p395 = scmp.le.s32.totalorder 2, %s13
      // Predicated region
      $region45: #{tpu_custom_call.1} parent=5 // pred_check
        %p396 = pneg %p395
      $region46: #{tpu_custom_call.1} parent=5 // pred_check_branch
        %398 = sbr.rel (%p396) target = $region48
      $region47: #{tpu_custom_call.1} parent=5 // pred_region
        %s399 = ssub.s32 %s13, 2
        // Predicated region
        $region49: #{tpu_custom_call.1} parent=47 // pred_check
          %p400 = pneg %p119
        $region50: #{tpu_custom_call.1} parent=47 // pred_check_branch
          %402 = sbr.rel (%p400) target = $region52
        $region51: #{tpu_custom_call.1} parent=47 // pred_region
          %s403 = sand.u32 %s104, 1
          %s404 = scalar_lea.sflag [#allocation5], %s403
          %s405 = sand.u32 %s104, 1
          %s406 = smul.addr %s405, 8
          %s407 = scalar_lea.vmem [#allocation4], %s406
          %408 = dma.done %s404, 128
        $region52: #{tpu_custom_call.1} parent=47 // pred_fallthru
          _
      $region48: #{tpu_custom_call.1} parent=5 // pred_fallthru
        _
    $region6: #{tpu_custom_call.1} parent=1 // loop_footer
      %s17 = sadd.s32 1, %s13
    $region7: #{tpu_custom_call.1} parent=1 // loop_footer_branch
      %12 = sbr.rel target = $region3
    $region8: #{tpu_custom_call.1} parent=1 // loop_exit
      _
    %409 = vsyncpa [#allocation5], 1
    %s410 = scalar_lea.sflag [#allocation5], 1
    %411 = vsyncpa %s410, 1
  %412 = vsyncmov [#allocation3]
  %s413 = vpop.sfrf %412
  %p414 = scmp.eq.s32.totalorder %s413, 0
  %p415 = pneg %p414
  %417 = shalt.err (%p415)

</llo_original>
